<compile_context>
chip_gen: v7x
topology: tpu7x:2x2x1
jax: 0.10.0
libtpu: 0.0.40
codegen_flags: <defaults>
</compile_context>

<pallas_src>
import functools

import jax
import jax.numpy as jnp
from jax import lax
from jax.experimental import pallas as pl
from jax.experimental.pallas import tpu as pltpu

LANE = 128


def _round_up(x, m):
    return (x + m - 1) // m * m


def _pick_tb(T, max_tb=16):
    tb = min(T, max_tb)
    while T % tb:
        tb -= 1
    return tb


# --------------------------------------------------------------------------
# Kernel 1: batched input projection  gates_x = x @ W_ih + bias  (all timesteps)
# --------------------------------------------------------------------------
def _gate_projection_kernel(x_ref, wih_ref, b_ref, gx_ref):
    gx_ref[...] = (
        jnp.dot(x_ref[...].astype(wih_ref.dtype), wih_ref[...],
                preferred_element_type=jnp.float32)
        + b_ref[...].astype(jnp.float32)
    ).astype(gx_ref.dtype)


def lstm_input_projection(x2d, w_ih_p, bias_p, tm=512):
    """x2d: (M, I) with M = T*B.  w_ih_p: (I, 4*Hp), bias_p: (1, 4*Hp).
    Returns gates_x: (M, 4*Hp) float32."""
    M, I = x2d.shape
    G = w_ih_p.shape[1]
    tm = min(tm, _round_up(M, 8))
    M_pad = _round_up(M, tm)
    if M_pad != M:
        x2d = jnp.pad(x2d, ((0, M_pad - M), (0, 0)))

    gx = pl.pallas_call(
        _gate_projection_kernel,
        out_shape=jax.ShapeDtypeStruct((M_pad, G), jnp.float32),
        grid_spec=pltpu.PrefetchScalarGridSpec(
            num_scalar_prefetch=0,
            grid=(M_pad // tm,),
            in_specs=[
                pl.BlockSpec((tm, I), lambda i: (i, 0)),   # x rows
                pl.BlockSpec((I, G), lambda i: (0, 0)),    # W_ih (invariant)
                pl.BlockSpec((1, G), lambda i: (0, 0)),    # bias (invariant)
            ],
            out_specs=pl.BlockSpec((tm, G), lambda i: (i, 0)),
        ),
        compiler_params=pltpu.CompilerParams(
            dimension_semantics=("parallel",)),
    )(x2d, w_ih_p, bias_p)
    return gx[:M]


# --------------------------------------------------------------------------
# Kernel 2: recurrence.  Consumes precomputed gates_x, does h @ W_hh + gates.
# --------------------------------------------------------------------------
def _lstm_recurrent_kernel(gx_ref, whh_hbm, h0_ref, c0_ref,
                           y_ref, hn_ref, cn_ref,
                           whh_vmem, whh_sem, h_sc, c_sc, *, Tb, Hp):
    """Grid = (T // Tb,), sequential ('arbitrary').

    gx_ref:   (Tb, B, 4*Hp)  precomputed x-gates for this time block
    whh_hbm:  (Hp, 4*Hp)     hidden->gates weight, raw HBM ref
    h0/c0:    (B, Hp)        initial state (padded)
    y_ref:    (Tb, B, Hp)    hidden outputs for this time block
    hn/cn:    (B, Hp)        final state (written on last grid step)
    whh_vmem: VMEM scratch holding W_hh single-buffered (filled once)
    h_sc/c_sc: VMEM scratch carrying the recurrent state across grid steps
    """
    blk = pl.program_id(0)

    @pl.when(blk == 0)
    def _():
        # Fill the single-buffered resident weight + initial state once.
        cp = pltpu.make_async_copy(whh_hbm, whh_vmem, whh_sem)
        cp.start()
        cp.wait()
        h_sc[...] = h0_ref[...].astype(jnp.float32)
        c_sc[...] = c0_ref[...].astype(jnp.float32)

    whh = whh_vmem[...]

    def step(t, carry):
        h, c = carry
        gates = (gx_ref[t].astype(jnp.float32)
                 + jnp.dot(h.astype(whh.dtype), whh,
                           preferred_element_type=jnp.float32))   # (B, 4*Hp)
        # PyTorch gate order i, f, g, o; Hp is a multiple of 128 so every slice
        # is lane-aligned (no relayout / masked ops).
        i_g = jax.nn.sigmoid(gates[:, 0 * Hp:1 * Hp])
        f_g = jax.nn.sigmoid(gates[:, 1 * Hp:2 * Hp])
        g_g = jnp.tanh(gates[:, 2 * Hp:3 * Hp])
        o_g = jax.nn.sigmoid(gates[:, 3 * Hp:4 * Hp])
        c_new = f_g * c + i_g * g_g
        h_new = o_g * jnp.tanh(c_new)
        y_ref[t] = h_new.astype(y_ref.dtype)
        return h_new, c_new

    h, c = lax.fori_loop(0, Tb, step, (h_sc[...], c_sc[...]), unroll=True)
    h_sc[...] = h
    c_sc[...] = c

    @pl.when(blk == pl.num_programs(0) - 1)
    def _():
        hn_ref[...] = h.astype(hn_ref.dtype)
        cn_ref[...] = c.astype(cn_ref.dtype)


def lstm_recurrence(gx, w_hh_p, h0, c0, tb=None):
    """gx: (T, B, 4*Hp) f32.  w_hh_p: (Hp, 4*Hp).  h0/c0: (B, Hp).
    Returns y (T, B, Hp) f32, h_n (B, Hp), c_n (B, Hp)."""
    T, B, G = gx.shape
    Hp = w_hh_p.shape[0]
    assert G == 4 * Hp and T >= 1
    if tb is None or T % tb:
        tb = _pick_tb(T)
    n_blk = T // tb

    kernel = functools.partial(_lstm_recurrent_kernel, Tb=tb, Hp=Hp)

    grid_spec = pltpu.PrefetchScalarGridSpec(
        num_scalar_prefetch=0,
        grid=(n_blk,),
        in_specs=[
            pl.BlockSpec((tb, B, G), lambda b: (b, 0, 0)),   # gates_x tile
            pl.BlockSpec(memory_space=pl.ANY),               # W_hh stays in HBM
            pl.BlockSpec((B, Hp), lambda b: (0, 0)),         # h0
            pl.BlockSpec((B, Hp), lambda b: (0, 0)),         # c0
        ],
        out_specs=[
            pl.BlockSpec((tb, B, Hp), lambda b: (b, 0, 0)),  # y tile (lane-dense)
            pl.BlockSpec((B, Hp), lambda b: (0, 0)),         # h_n
            pl.BlockSpec((B, Hp), lambda b: (0, 0)),         # c_n
        ],
        scratch_shapes=[
            pltpu.VMEM((Hp, G), w_hh_p.dtype),               # resident W_hh (1 buffer)
            pltpu.SemaphoreType.DMA(()),                     # its DMA semaphore
            pltpu.VMEM((B, Hp), jnp.float32),                # h carry
            pltpu.VMEM((B, Hp), jnp.float32),                # c carry
        ],
    )

    y, h_n, c_n = pl.pallas_call(
        kernel,
        out_shape=(
            jax.ShapeDtypeStruct((T, B, Hp), jnp.float32),
            jax.ShapeDtypeStruct((B, Hp), jnp.float32),
            jax.ShapeDtypeStruct((B, Hp), jnp.float32),
        ),
        grid_spec=grid_spec,
        # Time axis must stay 'arbitrary': the h/c carry lives in VMEM scratch.
        compiler_params=pltpu.CompilerParams(
            dimension_semantics=("arbitrary",)),
    )(gx, w_hh_p, h0, c0)
    return y, h_n, c_n


# --------------------------------------------------------------------------
# Parameters (torch-style init) + lane-padded kernel layout
# --------------------------------------------------------------------------
def init_lstm_params(key, ninp, nhid, nout, nlayers):
    """PyTorch-style U(-1/sqrt(H), 1/sqrt(H)) init.  Weights stored pre-transposed
    for matmul: (in_dim, 4H).  Bias is the combined b_ih + b_hh."""
    params = []
    for l in range(nlayers):
        in_dim = ninp if l == 0 else nhid
        h_dim = nhid if l != nlayers - 1 else nout
        k = 1.0 / jnp.sqrt(jnp.float32(h_dim))
        key, k1, k2, k3, k4 = jax.random.split(key, 5)
        w_ih = jax.random.uniform(k1, (in_dim, 4 * h_dim), jnp.float32, -k, k)
        w_hh = jax.random.uniform(k2, (h_dim, 4 * h_dim), jnp.float32, -k, k)
        b_ih = jax.random.uniform(k3, (4 * h_dim,), jnp.float32, -k, k)
        b_hh = jax.random.uniform(k4, (4 * h_dim,), jnp.float32, -k, k)
        bias = (b_ih + b_hh).reshape(1, 4 * h_dim)
        params.append(dict(w_ih=w_ih, w_hh=w_hh, bias=bias, h_dim=h_dim))
    return params


def _pad_gate_matrix(w, in_dim_p, h, h_p):
    """(in_dim, 4h) -> (in_dim_p, 4*h_p): zero-pad rows and per-gate columns."""
    in_dim = w.shape[0]
    w4 = w.reshape(in_dim, 4, h)
    w4 = jnp.pad(w4, ((0, in_dim_p - in_dim), (0, 0), (0, h_p - h)))
    return w4.reshape(in_dim_p, 4 * h_p)


def _pad_gate_bias(b, h, h_p):
    b4 = b.reshape(4, h)
    b4 = jnp.pad(b4, ((0, 0), (0, h_p - h)))
    return b4.reshape(1, 4 * h_p)


def pad_lstm_params(params, ninp, dtype=jnp.float32):
    """Build the lane-padded kernel layout.  For v6e/v7x production sizes,
    pass dtype=jnp.bfloat16 to halve weight VMEM/HBM traffic (carry stays f32)."""
    padded = []
    in_dim_p = ninp                       # layer-0 input dim kept as-is
    for p in params:
        H = p["h_dim"]
        Hp = _round_up(H, LANE)
        padded.append(dict(
            w_ih_p=_pad_gate_matrix(p["w_ih"], in_dim_p, H, Hp).astype(dtype),
            w_hh_p=_pad_gate_matrix(p["w_hh"], Hp, H, Hp).astype(dtype),
            bias_p=_pad_gate_bias(p["bias"][0], H, Hp),
            h=H, hp=Hp))
        in_dim_p = Hp                     # next layer consumes the padded output
    return padded


def lstm_forward_pallas(padded_params, x, hidden=None, tb=None):
    """Reproduces LSTM.forward: stacked LSTM layers -> (output, (h_list, c_list)).
    idrop / ldrop / odrop / weight-drop are identity in eval mode."""
    T, B, _ = x.shape
    cur = x                               # padded activations after layer 0
    h_list, c_list = [], []
    for l, p in enumerate(padded_params):
        H, Hp = p["h"], p["hp"]
        if hidden is None:
            h0 = jnp.zeros((B, Hp), jnp.float32)
            c0 = jnp.zeros((B, Hp), jnp.float32)
        else:
            h0 = jnp.pad(hidden[0][l].reshape(B, H).astype(jnp.float32),
                         ((0, 0), (0, Hp - H)))
            c0 = jnp.pad(hidden[1][l].reshape(B, H).astype(jnp.float32),
                         ((0, 0), (0, Hp - H)))

        # (1) batched x-projection over ALL timesteps (no sequential dependence)
        gx = lstm_input_projection(cur.reshape(T * B, cur.shape[-1]),
                                   p["w_ih_p"], p["bias_p"])
        gx = gx.reshape(T, B, 4 * Hp)
        # (2) sequential recurrence, Tb timesteps per grid step
        cur, h_n, c_n = lstm_recurrence(gx, p["w_hh_p"], h0, c0, tb=tb)

        h_list.append(h_n[:, :H].reshape(1, B, H).astype(x.dtype))
        c_list.append(c_n[:, :H].reshape(1, B, H).astype(x.dtype))

    out = cur[:, :, :padded_params[-1]["h"]].astype(x.dtype)
    return out, (h_list, c_list)


# ---------------- pure-JAX reference (sanity check) ----------------
def _lstm_layer_ref(x, w_ih, w_hh, bias, h0, c0):
    H = w_hh.shape[0]

    def step(carry, x_t):
        h, c = carry
        gates = x_t @ w_ih + h @ w_hh + bias[0]
        i = jax.nn.sigmoid(gates[:, 0 * H:1 * H])
        f = jax.nn.sigmoid(gates[:, 1 * H:2 * H])
        g = jnp.tanh(gates[:, 2 * H:3 * H])
        o = jax.nn.sigmoid(gates[:, 3 * H:4 * H])
        c_new = f * c + i * g
        h_new = o * jnp.tanh(c_new)
        return (h_new, c_new), h_new

    (h_n, c_n), ys = lax.scan(step, (h0, c0), x)
    return ys, h_n, c_n


def lstm_forward_ref(params, x, hidden=None):
    T, B, _ = x.shape
    output = x
    h_list, c_list = [], []
    for l, p in enumerate(params):
        H = p["h_dim"]
        h0 = jnp.zeros((B, H), x.dtype) if hidden is None else hidden[0][l].reshape(B, H)
        c0 = jnp.zeros((B, H), x.dtype) if hidden is None else hidden[1][l].reshape(B, H)
        output, h_n, c_n = _lstm_layer_ref(output, p["w_ih"], p["w_hh"], p["bias"], h0, c0)
        h_list.append(h_n.reshape(1, B, H))
        c_list.append(c_n.reshape(1, B, H))
    return output, (h_list, c_list)


if __name__ == "__main__":
    ninp, nhid, nout, nlayers = 16, 32, 24, 2
    T, B = 8, 4

    key = jax.random.PRNGKey(0)
    kx, kp = jax.random.split(key)
    x = jax.random.normal(kx, (T, B, ninp), jnp.float32)
    params = init_lstm_params(kp, ninp, nhid, nout, nlayers)
    padded = pad_lstm_params(params, ninp)          # f32 demo; bf16 for prod

    out, (h_list, c_list) = lstm_forward_pallas(padded, x, hidden=None)
    out = jax.block_until_ready(out)

    # Sanity check against a pure-JAX scan reference (unpadded parameters).
    out_ref, (h_ref, c_ref) = lstm_forward_ref(params, x, hidden=None)
    assert out.shape == (T, B, nout)
    assert h_list[0].shape == (1, B, nhid) and h_list[-1].shape == (1, B, nout)
    assert jnp.allclose(out, out_ref, rtol=1e-4, atol=1e-4)
    for l in range(nlayers):
        assert jnp.allclose(h_list[l], h_ref[l], rtol=1e-4, atol=1e-4)
        assert jnp.allclose(c_list[l], c_ref[l], rtol=1e-4, atol=1e-4)

    print("KERNEL_OK")
</pallas_src>

<mosaic_0001>
module attributes {stable_mosaic.version = 11 : i64} {
  func.func @_gate_projection_kernel(%arg0: i32, %arg1: memref<32x16xf32, #tpu.memory_space<vmem>>, %arg2: memref<16x512xf32, #tpu.memory_space<vmem>>, %arg3: memref<1x512xf32, #tpu.memory_space<vmem>>, %arg4: memref<32x512xf32, #tpu.memory_space<vmem>>) attributes {dimension_semantics = [#tpu.dimension_semantics<parallel>], iteration_bounds = array<i64: 1>, scalar_prefetch = 0 : i64, scratch_operands = 0 : i64, tpu.core_type = #tpu.core_type<tc>, window_params = [{transform_indices = @transform_0, window_bounds = array<i64: 32, 16>}, {pipeline_mode = #tpu.pipeline_mode<synchronous>, transform_indices = @transform_1, window_bounds = array<i64: 16, 512>}, {pipeline_mode = #tpu.pipeline_mode<synchronous>, transform_indices = @transform_2, window_bounds = array<i64: 1, 512>}, {transform_indices = @transform_3, window_bounds = array<i64: 32, 512>}]} {
    %c0 = arith.constant 0 : index
    %c0_0 = arith.constant 0 : index
    %0 = vector.load %arg1[%c0, %c0_0] : memref<32x16xf32, #tpu.memory_space<vmem>>, vector<32x16xf32>
    %c0_1 = arith.constant 0 : index
    %c0_2 = arith.constant 0 : index
    %1 = vector.load %arg2[%c0_1, %c0_2] : memref<16x512xf32, #tpu.memory_space<vmem>>, vector<16x512xf32>
    %cst = arith.constant dense<0.000000e+00> : vector<32x512xf32>
    %2 = tpu.matmul %0, %1, %cst {dimension_numbers = #tpu.dot_dimension_numbers<[1], [0], [0], [1], [0, 0, 1, 1], [], []>} : vector<32x16xf32>, vector<16x512xf32>, vector<32x512xf32> -> vector<32x512xf32>
    %c0_3 = arith.constant 0 : index
    %c0_4 = arith.constant 0 : index
    %3 = vector.load %arg3[%c0_3, %c0_4] : memref<1x512xf32, #tpu.memory_space<vmem>>, vector<1x512xf32>
    %4 = vector.broadcast %3 : vector<1x512xf32> to vector<32x512xf32>
    %5 = arith.addf %2, %4 : vector<32x512xf32>
    %c0_5 = arith.constant 0 : index
    %c0_6 = arith.constant 0 : index
    %6 = vector.load %arg4[%c0_5, %c0_6] : memref<32x512xf32, #tpu.memory_space<vmem>>, vector<32x512xf32>
    tpu.vector_store %arg4[%c0_5, %c0_6], %5 {strides = array<i32>} : memref<32x512xf32, #tpu.memory_space<vmem>>, vector<32x512xf32>,
    return
  }
  func.func @transform_0(%arg0: i32) -> (i32, i32) {
    %c0_i32 = arith.constant 0 : i32
    %c0_i32_0 = arith.constant 0 : i32
    return %arg0, %c0_i32 : i32, i32
  }
  func.func @transform_1(%arg0: i32) -> (i32, i32) {
    %c0_i32 = arith.constant 0 : i32
    %c0_i32_0 = arith.constant 0 : i32
    %c0_i32_1 = arith.constant 0 : i32
    return %c0_i32, %c0_i32_0 : i32, i32
  }
  func.func @transform_2(%arg0: i32) -> (i32, i32) {
    %c0_i32 = arith.constant 0 : i32
    %c0_i32_0 = arith.constant 0 : i32
    %c0_i32_1 = arith.constant 0 : i32
    return %c0_i32, %c0_i32_0 : i32, i32
  }
  func.func @transform_3(%arg0: i32) -> (i32, i32) {
    %c0_i32 = arith.constant 0 : i32
    %c0_i32_0 = arith.constant 0 : i32
    return %arg0, %c0_i32 : i32, i32
  }
}

</mosaic_0001>

<llo_original>
// kernel: tpu_custom_call.1
$region0: #{tpu_custom_call.1}
  #allocation0 [shape = 'u32[]', space=smem, size = 0x4, offset = 0x4, fixed_abs, tag = 'smem constant byte address 0x4 - core index']
  #allocation1 [shape = 'u32[144,128]{1,0:T(1,128)}', space=vmem, size = 0x12000, scoped, tag = 'internal scratch']
  %s0 = inlined_call_operand.vmem [shape: f32[32,16], index: 0, kind: input, shape index: {}]
  %s1 = inlined_call_operand.hbm [shape: f32[16,512], index: 1, kind: input, shape index: {}]
  %s2 = inlined_call_operand.vmem [shape: f32[1,512], index: 2, kind: input, shape index: {}]
  %s3 = inlined_call_operand.hbm [shape: f32[32,512], index: 3, kind: output, shape index: {}]
  %s4 = sld [smem:[#allocation0]]
  $region26: #{tpu_custom_call.1} parent=0
    _
  %s6 = ssub.s32 1, %s4
  %s7 = scalar_select 0, %s6, %s4
  $region1: #{tpu_custom_call.1} parent=0
    #allocation2 [shape = 'u8[32768]{0}', space=vmem, size = 0x8000, scoped, tag = 'input window, operand 1, single buffered']
    #allocation3 [shape = 's32[1]{0}', space=sflag, size = 0x4, scoped, tag = 'scoped memory for tpu_custom_call.1']
    #allocation4 [shape = 's32[1]{0}', space=sflag, size = 0x4, scoped, tag = 'scoped memory for tpu_custom_call.1']
    #allocation5 [shape = 'u8[65536]{0}', space=vmem, size = 0x10000, scoped, tag = 'output window, operand 0, single buffered']
    %8 = vsyncpa [#allocation3], 0
    %9 = vsyncpa [#allocation4], 0
    // Predicated region
    $region2: #{tpu_custom_call.1} parent=1 // pred_check
      _
    $region3: #{tpu_custom_call.1} parent=1 // pred_check_branch
      %11 = sbr.rel (0) target = $region5
    $region4: #{tpu_custom_call.1} parent=1 // pred_region
      _
    $region5: #{tpu_custom_call.1} parent=1 // pred_fallthru
      _
    // Predicated region
    $region6: #{tpu_custom_call.1} parent=1 // pred_check
      _
    $region7: #{tpu_custom_call.1} parent=1 // pred_check_branch
      %13 = sbr.rel (0) target = $region9
    $region8: #{tpu_custom_call.1} parent=1 // pred_region
      %s15 = ssub.s32 1024, 1024
      %16 = vsyncadd [#allocation3], %s15
      %s17 = sshll.u32 [#allocation2], 4
      %s18 = int_to_ptr.vmem [resolvable:$true] %s17
      %23 = dma.hbm_to_vmem [thread:$0]  %s1, 1024, %s18, [#allocation3], 512, 512, 32
    $region9: #{tpu_custom_call.1} parent=1 // pred_fallthru
      _
    // Predicated region
    $region10: #{tpu_custom_call.1} parent=1 // pred_check
      _
    $region11: #{tpu_custom_call.1} parent=1 // pred_check_branch
      %25 = sbr.rel (0) target = $region13
    $region12: #{tpu_custom_call.1} parent=1 // pred_region
      _
    $region13: #{tpu_custom_call.1} parent=1 // pred_fallthru
      _
    // Predicated region
    $region14: #{tpu_custom_call.1} parent=1 // pred_check
      _
    $region15: #{tpu_custom_call.1} parent=1 // pred_check_branch
      %27 = sbr.rel (0) target = $region17
    $region16: #{tpu_custom_call.1} parent=1 // pred_region
      %28 = dma.done [#allocation3], 1024
    $region17: #{tpu_custom_call.1} parent=1 // pred_fallthru
      _
    %v29 = vld [vmem:[%s0] sm:$0xff]
    %v30 = vld [vmem:[%s0 + $0x8] sm:$0xff]
    %v31 = vld [vmem:[%s0 + $0x10] sm:$0xff]
    %v32 = vld [vmem:[%s0 + $0x18] sm:$0xff]
    %v33 = vld [vmem:[#allocation2] sm:$0xff]
    %v34 = vld [vmem:[#allocation2 + $0x8] sm:$0xff]
    %v35 = vld [vmem:[#allocation2 + $0x10] sm:$0xff]
    %v36 = vld [vmem:[#allocation2 + $0x18] sm:$0xff]
    %v37 = vld [vmem:[#allocation2 + $0x20] sm:$0xff]
    %v38 = vld [vmem:[#allocation2 + $0x28] sm:$0xff]
    %v39 = vld [vmem:[#allocation2 + $0x30] sm:$0xff]
    %v40 = vld [vmem:[#allocation2 + $0x38] sm:$0xff]
    %v41 = vld [vmem:[%s2] sm:$0xf]
    %v43 = vlaneseq
    %v44 = vshrl.u32 %v43, 7
    %v45 = vsub.s32 0, %v44
    %v46 = vrot.slane %v41, %v45
    %v47 = vlaneseq
    %v48 = vshrl.u32 %v47, 7
    %v49 = vsub.s32 1, %v48
    %v50 = vrot.slane %v41, %v49
    %v51 = vlaneseq
    %v52 = vshrl.u32 %v51, 7
    %v53 = vsub.s32 2, %v52
    %v54 = vrot.slane %v41, %v53
    %v55 = vlaneseq
    %v56 = vshrl.u32 %v55, 7
    %v57 = vsub.s32 3, %v56
    %v58 = vrot.slane %v41, %v57
    %vm63 = vcmask 130048
    %v65 = vsel %vm63, %v29, 0
    %v68 = vsel %vm63, %v30, 0
    %v71 = vsel %vm63, %v31, 0
    %v74 = vsel %vm63, %v32, 0
    %76 = vmatprep.subr.mxu0 %v34
    %77 = vmatpush1.msra.mxu0 %v33
    %78 = vmatprep.subr.mxu0 %v38
    %79 = vmatpush1.msra.mxu0 %v37
    %80 = vmatprep.subr.mxu0 0.0
    %81 = vmatpush1.msra.mxu0 0.0
    %82 = vmatprep.subr.mxu0 0.0
    %83 = vmatpush1.msra.mxu0 0.0
    %84 = vmatprep.subr.mxu0 0.0
    %85 = vmatpush1.msra.mxu0 0.0
    %86 = vmatprep.subr.mxu0 0.0
    %87 = vmatpush1.msra.mxu0 0.0
    %88 = vmatprep.subr.mxu0 0.0
    %89 = vmatpush1.msra.mxu0 0.0
    %90 = vmatprep.subr.mxu0 0.0
    %91 = vmatpush1.msra.mxu0 0.0
    %92 = vmatprep.subr.mxu0 0.0
    %93 = vmatpush1.msra.mxu0 0.0
    %94 = vmatprep.subr.mxu0 0.0
    %95 = vmatpush1.msra.mxu0 0.0
    %96 = vmatprep.subr.mxu0 0.0
    %97 = vmatpush1.msra.mxu0 0.0
    %98 = vmatprep.subr.mxu0 0.0
    %99 = vmatpush1.msra.mxu0 0.0
    %100 = vmatprep.subr.mxu0 0.0
    %101 = vmatpush1.msra.mxu0 0.0
    %102 = vmatprep.subr.mxu0 0.0
    %103 = vmatpush1.msra.mxu0 0.0
    %104 = vmatprep.subr.mxu0 0.0
    %105 = vmatpush1.msra.mxu0 0.0
    %106 = vmatprep.subr.mxu0 0.0
    %107 = vmatpush1.msra.mxu0 0.0
    %108 = vmatprep.subr.mxu0 0.0
    %109 = vmatpush1.msra.mxu0 0.0
    %110 = vmatprep.subr.mxu0 0.0
    %111 = vmatpush1.msra.mxu0 0.0
    %112 = vmatprep.subr.mxu0 0.0
    %113 = vmatpush1.msra.mxu0 0.0
    %114 = vmatprep.subr.mxu0 0.0
    %115 = vmatpush1.msra.mxu0 0.0
    %116 = vmatprep.subr.mxu0 0.0
    %117 = vmatpush1.msra.mxu0 0.0
    %118 = vmatprep.subr.mxu0 0.0
    %119 = vmatpush1.msra.mxu0 0.0
    %120 = vmatprep.subr.mxu0 0.0
    %121 = vmatpush1.msra.mxu0 0.0
    %122 = vmatprep.subr.mxu0 0.0
    %123 = vmatpush1.msra.mxu0 0.0
    %124 = vmatprep.subr.mxu0 0.0
    %125 = vmatpush1.msra.mxu0 0.0
    %126 = vmatprep.subr.mxu0 0.0
    %127 = vmatpush1.msra.mxu0 0.0
    %128 = vmatprep.subr.mxu0 0.0
    %129 = vmatpush1.msra.mxu0 0.0
    %130 = vmatprep.subr.mxu0 0.0
    %131 = vmatpush1.msra.mxu0 0.0
    %132 = vmatprep.subr.mxu0 0.0
    %133 = vmatpush1.msra.mxu0 0.0
    %134 = vmatprep.subr.mxu0 0.0
    %135 = vmatpush1.msra.mxu0 0.0
    %136 = vmatprep.subr.mxu0 0.0
    %137 = vmatpush1.msra.mxu0 0.0
    %138 = vmatprep.subr.mxu0 0.0
    %139 = vmatpush1.msra.mxu0 0.0
    %140 = vmatprep.mubr.f32.mxu0 0.0
    %141 = vmatmul.mubr.f32.gmra.mrb[0].mxu0 %v65
    %v142 = vpop.f32.mrb[0].mxu0
    %v143 = vadd.f32 %v46, %v142
    %v144 = vpop.f32.mrb[0].mxu0
    %v145 = vadd.f32 %v50, %v144
    %146 = vmatprep.mubr.f32.mxu0 0.0
    %147 = vmatmul.mubr.f32.gmra.mrb[0].mxu0 %v68
    %v148 = vpop.f32.mrb[0].mxu0
    %v149 = vadd.f32 %v46, %v148
    %v150 = vpop.f32.mrb[0].mxu0
    %v151 = vadd.f32 %v50, %v150
    %152 = vmatprep.mubr.f32.mxu0 0.0
    %153 = vmatmul.mubr.f32.gmra.mrb[0].mxu0 %v71
    %v154 = vpop.f32.mrb[0].mxu0
    %v155 = vadd.f32 %v46, %v154
    %v156 = vpop.f32.mrb[0].mxu0
    %v157 = vadd.f32 %v50, %v156
    %158 = vmatprep.mubr.f32.mxu0 0.0
    %159 = vmatmul.mubr.f32.gmra.mrb[0].mxu0 %v74
    %v160 = vpop.f32.mrb[0].mxu0
    %v161 = vadd.f32 %v46, %v160
    %v162 = vpop.f32.mrb[0].mxu0
    %v163 = vadd.f32 %v50, %v162
    %164 = vdwg.mxu0
    %165 = vmatprep.subr.mxu0 %v36
    %166 = vmatpush1.msra.mxu0 %v35
    %167 = vmatprep.subr.mxu0 %v40
    %168 = vmatpush1.msra.mxu0 %v39
    %169 = vmatprep.subr.mxu0 0.0
    %170 = vmatpush1.msra.mxu0 0.0
    %171 = vmatprep.subr.mxu0 0.0
    %172 = vmatpush1.msra.mxu0 0.0
    %173 = vmatprep.subr.mxu0 0.0
    %174 = vmatpush1.msra.mxu0 0.0
    %175 = vmatprep.subr.mxu0 0.0
    %176 = vmatpush1.msra.mxu0 0.0
    %177 = vmatprep.subr.mxu0 0.0
    %178 = vmatpush1.msra.mxu0 0.0
    %179 = vmatprep.subr.mxu0 0.0
    %180 = vmatpush1.msra.mxu0 0.0
    %181 = vmatprep.subr.mxu0 0.0
    %182 = vmatpush1.msra.mxu0 0.0
    %183 = vmatprep.subr.mxu0 0.0
    %184 = vmatpush1.msra.mxu0 0.0
    %185 = vmatprep.subr.mxu0 0.0
    %186 = vmatpush1.msra.mxu0 0.0
    %187 = vmatprep.subr.mxu0 0.0
    %188 = vmatpush1.msra.mxu0 0.0
    %189 = vmatprep.subr.mxu0 0.0
    %190 = vmatpush1.msra.mxu0 0.0
    %191 = vmatprep.subr.mxu0 0.0
    %192 = vmatpush1.msra.mxu0 0.0
    %193 = vmatprep.subr.mxu0 0.0
    %194 = vmatpush1.msra.mxu0 0.0
    %195 = vmatprep.subr.mxu0 0.0
    %196 = vmatpush1.msra.mxu0 0.0
    %197 = vmatprep.subr.mxu0 0.0
    %198 = vmatpush1.msra.mxu0 0.0
    %199 = vmatprep.subr.mxu0 0.0
    %200 = vmatpush1.msra.mxu0 0.0
    %201 = vmatprep.subr.mxu0 0.0
    %202 = vmatpush1.msra.mxu0 0.0
    %203 = vmatprep.subr.mxu0 0.0
    %204 = vmatpush1.msra.mxu0 0.0
    %205 = vmatprep.subr.mxu0 0.0
    %206 = vmatpush1.msra.mxu0 0.0
    %207 = vmatprep.subr.mxu0 0.0
    %208 = vmatpush1.msra.mxu0 0.0
    %209 = vmatprep.subr.mxu0 0.0
    %210 = vmatpush1.msra.mxu0 0.0
    %211 = vmatprep.subr.mxu0 0.0
    %212 = vmatpush1.msra.mxu0 0.0
    %213 = vmatprep.subr.mxu0 0.0
    %214 = vmatpush1.msra.mxu0 0.0
    %215 = vmatprep.subr.mxu0 0.0
    %216 = vmatpush1.msra.mxu0 0.0
    %217 = vmatprep.subr.mxu0 0.0
    %218 = vmatpush1.msra.mxu0 0.0
    %219 = vmatprep.subr.mxu0 0.0
    %220 = vmatpush1.msra.mxu0 0.0
    %221 = vmatprep.subr.mxu0 0.0
    %222 = vmatpush1.msra.mxu0 0.0
    %223 = vmatprep.subr.mxu0 0.0
    %224 = vmatpush1.msra.mxu0 0.0
    %225 = vmatprep.subr.mxu0 0.0
    %226 = vmatpush1.msra.mxu0 0.0
    %227 = vmatprep.subr.mxu0 0.0
    %228 = vmatpush1.msra.mxu0 0.0
    %229 = vmatprep.mubr.f32.mxu0 0.0
    %230 = vmatmul.mubr.f32.gmra.mrb[0].mxu0 %v65
    %v231 = vpop.f32.mrb[0].mxu0
    %v232 = vadd.f32 %v54, %v231
    %v233 = vpop.f32.mrb[0].mxu0
    %v234 = vadd.f32 %v58, %v233
    %235 = vmatprep.mubr.f32.mxu0 0.0
    %236 = vmatmul.mubr.f32.gmra.mrb[0].mxu0 %v68
    %v237 = vpop.f32.mrb[0].mxu0
    %v238 = vadd.f32 %v54, %v237
    %v239 = vpop.f32.mrb[0].mxu0
    %v240 = vadd.f32 %v58, %v239
    %241 = vmatprep.mubr.f32.mxu0 0.0
    %242 = vmatmul.mubr.f32.gmra.mrb[0].mxu0 %v71
    %v243 = vpop.f32.mrb[0].mxu0
    %v244 = vadd.f32 %v54, %v243
    %v245 = vpop.f32.mrb[0].mxu0
    %v246 = vadd.f32 %v58, %v245
    %247 = vmatprep.mubr.f32.mxu0 0.0
    %248 = vmatmul.mubr.f32.gmra.mrb[0].mxu0 %v74
    %v249 = vpop.f32.mrb[0].mxu0
    %v250 = vadd.f32 %v54, %v249
    %v251 = vpop.f32.mrb[0].mxu0
    %v252 = vadd.f32 %v58, %v251
    %253 = vdwg.mxu0
    %254 = vst [vmem:[#allocation5] sm:$0xff] %v143
    %255 = vst [vmem:[#allocation5 + $0x8] sm:$0xff] %v145
    %256 = vst [vmem:[#allocation5 + $0x10] sm:$0xff] %v232
    %257 = vst [vmem:[#allocation5 + $0x18] sm:$0xff] %v234
    %258 = vst [vmem:[#allocation5 + $0x20] sm:$0xff] %v149
    %259 = vst [vmem:[#allocation5 + $0x28] sm:$0xff] %v151
    %260 = vst [vmem:[#allocation5 + $0x30] sm:$0xff] %v238
    %261 = vst [vmem:[#allocation5 + $0x38] sm:$0xff] %v240
    %262 = vst [vmem:[#allocation5 + $0x40] sm:$0xff] %v155
    %263 = vst [vmem:[#allocation5 + $0x48] sm:$0xff] %v157
    %264 = vst [vmem:[#allocation5 + $0x50] sm:$0xff] %v244
    %265 = vst [vmem:[#allocation5 + $0x58] sm:$0xff] %v246
    %266 = vst [vmem:[#allocation5 + $0x60] sm:$0xff] %v161
    %267 = vst [vmem:[#allocation5 + $0x68] sm:$0xff] %v163
    %268 = vst [vmem:[#allocation5 + $0x70] sm:$0xff] %v250
    %269 = vst [vmem:[#allocation5 + $0x78] sm:$0xff] %v252
    // Predicated region
    $region18: #{tpu_custom_call.1} parent=1 // pred_check
      _
    $region19: #{tpu_custom_call.1} parent=1 // pred_check_branch
      %271 = sbr.rel (0) target = $region21
    $region20: #{tpu_custom_call.1} parent=1 // pred_region
      %s273 = ssub.s32 2048, 2048
      %274 = vsyncadd [#allocation4], %s273
      %s275 = sshll.u32 [#allocation5], 4
      %s276 = int_to_ptr.vmem [resolvable:$true] %s275
      %281 = dma.vmem_to_hbm [thread:$0]  %s276, 2048, %s3, [#allocation4], 512, 512, 32
    $region21: #{tpu_custom_call.1} parent=1 // pred_fallthru
      _
    // Predicated region
    $region22: #{tpu_custom_call.1} parent=1 // pred_check
      _
    $region23: #{tpu_custom_call.1} parent=1 // pred_check_branch
      %283 = sbr.rel (0) target = $region25
    $region24: #{tpu_custom_call.1} parent=1 // pred_region
      %284 = dma.done [#allocation4], 2048
    $region25: #{tpu_custom_call.1} parent=1 // pred_fallthru
      _
    %285 = vsyncpa [#allocation3], 1
    %286 = vsyncpa [#allocation4], 1

</llo_original>
